<compile_context>
chip_gen: v5e
topology: v5e:2x2
jax: 0.10.0
libtpu: 0.0.40
codegen_flags: <defaults>
</compile_context>

<pallas_src>
import functools
import math

import jax
import jax.numpy as jnp
from jax.experimental import pallas as pl
from jax.experimental.pallas import tpu as pltpu


# ------------------------------ Pallas kernel --------------------------------

def _fused_gnn_kernel(bias_ref, s_ref, z_ref, *refs, layer_specs):
    """Fused MultiLayerGNN forward, all batch elements in one shot.

    Operands (batch merged into lanes, last-dim layout (b, f)):
      bias_ref : [n_layers]                  f32, SMEM — per-layer sum_k bias[k]
      s_ref    : [N, N]                      compute dtype — shared GSO
      z_ref    : [N, B*F0]                   compute dtype — input signal
      c_ref_l  : [order_l*B*F_in, B*F_out]   compute dtype — tap-concatenated,
                 batch block-diagonal coefficients for layer l
      w_ref    : [B*F_last, F_pad]           compute dtype — batch block-diag
                 readout weight, zero-padded to a 128-lane multiple
      b_ref    : [1, F_pad]                  f32 — readout bias, same padding
      o_ref    : [N, F_pad]                  f32 — lane-dense output slab
    layer_specs: static tuple of (order, use_activation) per layer.
    """
    n_layers = len(layer_specs)
    c_refs = refs[:n_layers]
    w_ref = refs[n_layers]
    b_ref = refs[n_layers + 1]
    o_ref = refs[n_layers + 2]

    s = s_ref[...]                      # [N, N], resident across all layers
    z = z_ref[...]                      # [N, B*F0]

    for li, ((order, use_act), c_ref) in enumerate(zip(layer_specs, c_refs)):
        # Build Z_cat = [Z | S@Z | S^2@Z | ...] along lanes: one propagation
        # matmul per tap, shared by every batch element (S has no batch dim)...
        taps = [z]
        for _ in range(1, order):       # static unroll
            z = jnp.dot(s, z, preferred_element_type=jnp.float32).astype(s.dtype)
            taps.append(z)
        z_cat = taps[0] if order == 1 else jnp.concatenate(taps, axis=-1)
        # ...then ONE MXU matmul against the combined coefficient matrix
        # replaces `order` separate low-K matmuls.
        acc = jnp.dot(z_cat, c_ref[...], preferred_element_type=jnp.float32)
        acc = acc + bias_ref[li]        # scalar tap-bias sum (zero if use_bias=False)
        if use_act:
            acc = jnp.maximum(acc, 0.0)
        z = acc.astype(s.dtype)         # activation fed to next layer / readout

    # Readout into the lane-dense padded slab -> full unmasked vector stores.
    y = jnp.dot(z, w_ref[...], preferred_element_type=jnp.float32) + b_ref[...]
    o_ref[...] = y.astype(o_ref.dtype)


# ------------------------------- JAX wrapper ---------------------------------

def multilayer_gnn(params, S, X, use_activation=True, compute_dtype=jnp.bfloat16):
    """Fused forward pass: all GraphFilter layers + linear readout, one pallas_call."""
    B, N, f0 = X.shape
    W, b = params["readout"]
    f_last, f_ro = W.shape
    eye_b = jnp.eye(B, dtype=jnp.float32)

    # Batch merge: carry the signal as [N, B*F] (batch in lanes) so every graph
    # propagation is a single shared S @ [N, B*F] matmul.
    z0 = jnp.transpose(X, (1, 0, 2)).reshape(N, B * f0).astype(compute_dtype)
    S_c = S.astype(compute_dtype)

    # Per layer: tap-concatenate the coefficients along rows and expand them
    # block-diagonally over batch, so the whole tap sum is one matmul against
    # Z_cat ([N, order*B*F_in]):
    #   C_comb[k*B*Fi + b*Fi + f, b*Fo + g] = coeffs[k, f, g]
    coeffs_comb = []
    layer_specs = []
    for coeffs, _bias in params["layers"]:
        order, f_in, f_out = coeffs.shape
        c_comb = jnp.einsum('kfg,bc->kbfcg', coeffs.astype(jnp.float32), eye_b)
        c_comb = c_comb.reshape(order * B * f_in, B * f_out).astype(compute_dtype)
        coeffs_comb.append(c_comb)
        layer_specs.append((int(order), bool(use_activation)))
    layer_specs = tuple(layer_specs)

    # Per-layer tap-bias sums as a runtime SMEM operand (jit-safe; zeros for
    # use_bias=False, as in the PyTorch module's default).
    bias_sums = jnp.stack(
        [jnp.sum(bias) for _, bias in params["layers"]]).astype(jnp.float32)

    # Readout: block-diagonal over batch, zero-padded to a lane-dense
    # (>=128, multiple-of-128) output slab so the final store is unmasked.
    f_out_b = B * f_ro
    f_pad = max(128, -(-f_out_b // 128) * 128)
    w_comb = jnp.einsum('fg,bc->bfcg', W.astype(jnp.float32), eye_b)
    w_comb = w_comb.reshape(B * f_last, f_out_b)
    w_pad = jnp.pad(w_comb, ((0, 0), (0, f_pad - f_out_b))).astype(compute_dtype)
    b_pad = jnp.pad(jnp.tile(b.astype(jnp.float32), (1, B)),
                    ((0, 0), (0, f_pad - f_out_b)))

    kernel = functools.partial(_fused_gnn_kernel, layer_specs=layer_specs)

    vmem = pl.BlockSpec(memory_space=pltpu.MemorySpace.VMEM)
    smem = pl.BlockSpec(memory_space=pltpu.MemorySpace.SMEM)
    in_specs = [smem, vmem, vmem] + [vmem] * len(coeffs_comb) + [vmem, vmem]

    out = pl.pallas_call(
        kernel,
        out_shape=jax.ShapeDtypeStruct((N, f_pad), jnp.float32),
        in_specs=in_specs,
        out_specs=vmem,
        compiler_params=pltpu.CompilerParams(
            vmem_limit_bytes=32 * 1024 * 1024),   # far above this toy's needs; portable
    )(bias_sums, S_c, z0, *coeffs_comb, w_pad, b_pad)

    # Undo the lane packing/padding: [N, F_pad] -> [B, N, F_ro].
    return jnp.transpose(out[:, :f_out_b].reshape(N, B, f_ro), (1, 0, 2))


# ---------------------------- deterministic init ------------------------------

def init_params(key, n_features_in, n_filters_per_bank, banks_order, n_readout_out):
    params = {"layers": []}
    f_in = n_features_in
    for f_out, order in zip(n_filters_per_bank, banks_order):
        key, k1 = jax.random.split(key)
        stdv = 1.0 / math.sqrt(order)            # reset_parameters: 1/sqrt(len(coeffs))
        coeffs = jax.random.uniform(
            k1, (order, f_in, f_out), jnp.float32, minval=-stdv, maxval=stdv)
        bias = jnp.zeros((order,), jnp.float32)  # use_bias=False -> zeros
        params["layers"].append((coeffs, bias))
        f_in = f_out
    key, kw, kb = jax.random.split(key, 3)
    bound = 1.0 / math.sqrt(f_in)                # nn.Linear default init bound
    W = jax.random.uniform(kw, (f_in, n_readout_out), jnp.float32, -bound, bound)
    b = jax.random.uniform(kb, (1, n_readout_out), jnp.float32, -bound, bound)
    params["readout"] = (W, b)
    return params


# ------------------------------ pure-JAX refs ---------------------------------

def reference_gnn_f32(params, S, X, use_activation=True):
    """Full-f32 reference with the original module semantics."""
    h = X
    for coeffs, bias in params["layers"]:
        order = coeffs.shape[0]
        z = h
        acc = 0.0
        for k in range(order):
            acc = acc + jnp.einsum('bnf,fg->bng', z, coeffs[k]) + bias[k]
            if k + 1 < order:
                z = jnp.einsum('nm,bmf->bnf', S, z)
        if use_activation:
            acc = jnp.maximum(acc, 0.0)
        h = acc
    W, b = params["readout"]
    return jnp.einsum('bnf,fo->bno', h, W) + b[None]


def reference_gnn_mixed(params, S, X, use_activation=True, compute_dtype=jnp.bfloat16):
    """Reference mirroring the kernel's bf16-storage / f32-accumulate precision."""
    f32 = jnp.float32
    S32 = S.astype(compute_dtype).astype(f32)
    h = X.astype(compute_dtype)
    for coeffs, bias in params["layers"]:
        c32 = coeffs.astype(compute_dtype).astype(f32)
        order = coeffs.shape[0]
        z = h
        acc = jnp.einsum('bnf,fg->bng', z.astype(f32), c32[0])
        for k in range(1, order):
            z = jnp.einsum('nm,bmf->bnf', S32, z.astype(f32)).astype(compute_dtype)
            acc = acc + jnp.einsum('bnf,fg->bng', z.astype(f32), c32[k])
        acc = acc + jnp.sum(bias)
        if use_activation:
            acc = jnp.maximum(acc, 0.0)
        h = acc.astype(compute_dtype)
    W, b = params["readout"]
    W32 = W.astype(compute_dtype).astype(f32)
    return jnp.einsum('bnf,fo->bno', h.astype(f32), W32) + b.astype(f32)[None]


# ----------------------------------- main --------------------------------------

if __name__ == "__main__":
    key = jax.random.PRNGKey(0)

    B, N, F_IN = 2, 16, 4
    N_FILTERS_PER_BANK = (8, 8)
    BANKS_ORDER = (3, 2)
    N_READOUT_OUT = 4

    key, k_s, k_x, k_p = jax.random.split(key, 4)

    # Deterministic symmetric, normalized graph shift operator.
    A = jax.random.uniform(k_s, (N, N), jnp.float32)
    A = 0.5 * (A + A.T)
    A = A * (1.0 - jnp.eye(N, dtype=jnp.float32))
    S = A / jnp.max(jnp.sum(A, axis=1))          # keep spectral radius <= 1

    X = jax.random.normal(k_x, (B, N, F_IN), jnp.float32)

    params = init_params(k_p, F_IN, N_FILTERS_PER_BANK, BANKS_ORDER, N_READOUT_OUT)

    out = multilayer_gnn(params, S, X)
    out = jax.block_until_ready(out)
    assert out.shape == (B, N, N_READOUT_OUT)

    # Tight check vs a reference that mirrors the kernel's bf16/f32 precision.
    ref_mixed = reference_gnn_mixed(params, S, X)
    assert jnp.allclose(out, ref_mixed, atol=1e-2, rtol=1e-2), \
        float(jnp.max(jnp.abs(out - ref_mixed)))

    # Sanity check vs the full-f32 original-module semantics.
    ref_f32 = reference_gnn_f32(params, S, X)
    assert jnp.allclose(out, ref_f32, atol=5e-2, rtol=5e-2), \
        float(jnp.max(jnp.abs(out - ref_f32)))

    print("KERNEL_OK")
</pallas_src>

<mosaic_0001>
module attributes {stable_mosaic.version = 11 : i64} {
  func.func @_fused_gnn_kernel(%arg0: memref<2xf32, #tpu.memory_space<smem>>, %arg1: memref<16x16xbf16, #tpu.memory_space<vmem>>, %arg2: memref<16x8xbf16, #tpu.memory_space<vmem>>, %arg3: memref<24x16xbf16, #tpu.memory_space<vmem>>, %arg4: memref<32x16xbf16, #tpu.memory_space<vmem>>, %arg5: memref<16x128xbf16, #tpu.memory_space<vmem>>, %arg6: memref<1x128xf32, #tpu.memory_space<vmem>>, %arg7: memref<16x128xf32, #tpu.memory_space<vmem>>) attributes {dimension_semantics = [], scalar_prefetch = 0 : i64, scratch_operands = 0 : i64, tpu.core_type = #tpu.core_type<tc>} {
    %c0 = arith.constant 0 : index
    %c0_0 = arith.constant 0 : index
    %0 = vector.load %arg1[%c0, %c0_0] : memref<16x16xbf16, #tpu.memory_space<vmem>>, vector<16x16xbf16>
    %c0_1 = arith.constant 0 : index
    %c0_2 = arith.constant 0 : index
    %1 = vector.load %arg2[%c0_1, %c0_2] : memref<16x8xbf16, #tpu.memory_space<vmem>>, vector<16x8xbf16>
    %cst = arith.constant dense<0.000000e+00> : vector<16x8xf32>
    %2 = tpu.matmul %0, %1, %cst {dimension_numbers = #tpu.dot_dimension_numbers<[1], [0], [0], [1], [0, 0, 1, 1], [], []>} : vector<16x16xbf16>, vector<16x8xbf16>, vector<16x8xf32> -> vector<16x8xf32>
    %3 = arith.truncf %2 : vector<16x8xf32> to vector<16x8xbf16>
    %cst_3 = arith.constant dense<0.000000e+00> : vector<16x8xf32>
    %4 = tpu.matmul %0, %3, %cst_3 {dimension_numbers = #tpu.dot_dimension_numbers<[1], [0], [0], [1], [0, 0, 1, 1], [], []>} : vector<16x16xbf16>, vector<16x8xbf16>, vector<16x8xf32> -> vector<16x8xf32>
    %5 = arith.truncf %4 : vector<16x8xf32> to vector<16x8xbf16>
    %6 = tpu.concatenate %1, %3, %5 in 1 : vector<16x8xbf16>, vector<16x8xbf16>, vector<16x8xbf16> -> vector<16x24xbf16>
    %c0_4 = arith.constant 0 : index
    %c0_5 = arith.constant 0 : index
    %7 = vector.load %arg3[%c0_4, %c0_5] : memref<24x16xbf16, #tpu.memory_space<vmem>>, vector<24x16xbf16>
    %cst_6 = arith.constant dense<0.000000e+00> : vector<16x16xf32>
    %8 = tpu.matmul %6, %7, %cst_6 {dimension_numbers = #tpu.dot_dimension_numbers<[1], [0], [0], [1], [0, 0, 1, 1], [], []>} : vector<16x24xbf16>, vector<24x16xbf16>, vector<16x16xf32> -> vector<16x16xf32>
    %c0_7 = arith.constant 0 : index
    %9 = memref.load %arg0[%c0_7] : memref<2xf32, #tpu.memory_space<smem>>
    %10 = vector.broadcast %9 : f32 to vector<16x16xf32>
    %11 = arith.addf %8, %10 : vector<16x16xf32>
    %cst_8 = arith.constant 0.000000e+00 : f32
    %12 = vector.broadcast %cst_8 : f32 to vector<16x16xf32>
    %13 = arith.maximumf %11, %12 : vector<16x16xf32>
    %14 = arith.truncf %13 : vector<16x16xf32> to vector<16x16xbf16>
    %cst_9 = arith.constant dense<0.000000e+00> : vector<16x16xf32>
    %15 = tpu.matmul %0, %14, %cst_9 {dimension_numbers = #tpu.dot_dimension_numbers<[1], [0], [0], [1], [0, 0, 1, 1], [], []>} : vector<16x16xbf16>, vector<16x16xbf16>, vector<16x16xf32> -> vector<16x16xf32>
    %16 = arith.truncf %15 : vector<16x16xf32> to vector<16x16xbf16>
    %17 = tpu.concatenate %14, %16 in 1 : vector<16x16xbf16>, vector<16x16xbf16> -> vector<16x32xbf16>
    %c0_10 = arith.constant 0 : index
    %c0_11 = arith.constant 0 : index
    %18 = vector.load %arg4[%c0_10, %c0_11] : memref<32x16xbf16, #tpu.memory_space<vmem>>, vector<32x16xbf16>
    %cst_12 = arith.constant dense<0.000000e+00> : vector<16x16xf32>
    %19 = tpu.matmul %17, %18, %cst_12 {dimension_numbers = #tpu.dot_dimension_numbers<[1], [0], [0], [1], [0, 0, 1, 1], [], []>} : vector<16x32xbf16>, vector<32x16xbf16>, vector<16x16xf32> -> vector<16x16xf32>
    %c1 = arith.constant 1 : index
    %20 = memref.load %arg0[%c1] : memref<2xf32, #tpu.memory_space<smem>>
    %21 = vector.broadcast %20 : f32 to vector<16x16xf32>
    %22 = arith.addf %19, %21 : vector<16x16xf32>
    %cst_13 = arith.constant 0.000000e+00 : f32
    %23 = vector.broadcast %cst_13 : f32 to vector<16x16xf32>
    %24 = arith.maximumf %22, %23 : vector<16x16xf32>
    %25 = arith.truncf %24 : vector<16x16xf32> to vector<16x16xbf16>
    %c0_14 = arith.constant 0 : index
    %c0_15 = arith.constant 0 : index
    %26 = vector.load %arg5[%c0_14, %c0_15] : memref<16x128xbf16, #tpu.memory_space<vmem>>, vector<16x128xbf16>
    %cst_16 = arith.constant dense<0.000000e+00> : vector<16x128xf32>
    %27 = tpu.matmul %25, %26, %cst_16 {dimension_numbers = #tpu.dot_dimension_numbers<[1], [0], [0], [1], [0, 0, 1, 1], [], []>} : vector<16x16xbf16>, vector<16x128xbf16>, vector<16x128xf32> -> vector<16x128xf32>
    %c0_17 = arith.constant 0 : index
    %c0_18 = arith.constant 0 : index
    %28 = vector.load %arg6[%c0_17, %c0_18] : memref<1x128xf32, #tpu.memory_space<vmem>>, vector<1x128xf32>
    %29 = vector.broadcast %28 : vector<1x128xf32> to vector<16x128xf32>
    %30 = arith.addf %27, %29 : vector<16x128xf32>
    %c0_19 = arith.constant 0 : index
    %c0_20 = arith.constant 0 : index
    %31 = vector.load %arg7[%c0_19, %c0_20] : memref<16x128xf32, #tpu.memory_space<vmem>>, vector<16x128xf32>
    tpu.vector_store %arg7[%c0_19, %c0_20], %30 {strides = array<i32>} : memref<16x128xf32, #tpu.memory_space<vmem>>, vector<16x128xf32>,
    return
  }
}

</mosaic_0001>

<llo_original>
// kernel: tpu_custom_call.1
$region0: #{tpu_custom_call.1}
  #allocation0 [shape = 'u32[]', space=smem, size = 0x4, offset = 0x4, fixed_abs, tag = 'smem constant byte address 0x4 - core index']
  #allocation1 [shape = 'u32[72,128]{1,0:T(1,128)}', space=vmem, size = 0x9000, scoped, tag = 'internal scratch']
  %s0 = inlined_call_operand.vmem [shape: f32[2], index: 0, kind: input, shape index: {}]
  %s1 = inlined_call_operand.vmem [shape: bf16[16,16], index: 1, kind: input, shape index: {}]
  %s2 = inlined_call_operand.vmem [shape: bf16[16,8], index: 2, kind: input, shape index: {}]
  %s3 = inlined_call_operand.vmem [shape: bf16[24,16], index: 3, kind: input, shape index: {}]
  %s4 = inlined_call_operand.vmem [shape: bf16[32,16], index: 4, kind: input, shape index: {}]
  %s5 = inlined_call_operand.vmem [shape: bf16[16,128], index: 5, kind: input, shape index: {}]
  %s6 = inlined_call_operand.vmem [shape: f32[1,128], index: 6, kind: input, shape index: {}]
  %s7 = inlined_call_operand.hbm [shape: f32[16,128], index: 7, kind: output, shape index: {}]
  %s8 = sld [smem:[#allocation0]]
  $region42: #{tpu_custom_call.1} parent=0
    _
  %s10 = ssub.s32 1, %s8
  %s11 = scalar_select 0, %s10, %s8
  $region1: #{tpu_custom_call.1} parent=0
    #allocation2 [shape = 'u8[512]{0}', space=smem, size = 0x200, scoped, tag = 'input window, operand 0, single buffered']
    #allocation3 [shape = 's32[1]{0}', space=sflag, size = 0x4, scoped, tag = 'scoped memory for tpu_custom_call.1']
    #allocation4 [shape = 's32[1]{0}', space=sflag, size = 0x4, scoped, tag = 'scoped memory for tpu_custom_call.1']
    #allocation5 [shape = 'u8[8192]{0}', space=vmem, size = 0x2000, scoped, tag = 'output window, operand 0, single buffered']
    %12 = vsyncpa [#allocation4], 0
    %13 = vsyncpa [#allocation3], 0
    // Predicated region
    $region2: #{tpu_custom_call.1} parent=1 // pred_check
      _
    $region3: #{tpu_custom_call.1} parent=1 // pred_check_branch
      %15 = sbr.rel (0) target = $region5
    $region4: #{tpu_custom_call.1} parent=1 // pred_region
      %17 = vsyncadd [#allocation4], 0
      %s19 = sshll.u32 %s0, 4
      %s20 = int_to_ptr.vmem [resolvable:$true] %s19
      %22 = dma.vmem_to_smem %s20, 16, [#allocation2], [#allocation4]
    $region5: #{tpu_custom_call.1} parent=1 // pred_fallthru
      _
    // Predicated region
    $region6: #{tpu_custom_call.1} parent=1 // pred_check
      _
    $region7: #{tpu_custom_call.1} parent=1 // pred_check_branch
      %24 = sbr.rel (0) target = $region9
    $region8: #{tpu_custom_call.1} parent=1 // pred_region
      _
    $region9: #{tpu_custom_call.1} parent=1 // pred_fallthru
      _
    // Predicated region
    $region10: #{tpu_custom_call.1} parent=1 // pred_check
      _
    $region11: #{tpu_custom_call.1} parent=1 // pred_check_branch
      %26 = sbr.rel (0) target = $region13
    $region12: #{tpu_custom_call.1} parent=1 // pred_region
      _
    $region13: #{tpu_custom_call.1} parent=1 // pred_fallthru
      _
    // Predicated region
    $region14: #{tpu_custom_call.1} parent=1 // pred_check
      _
    $region15: #{tpu_custom_call.1} parent=1 // pred_check_branch
      %28 = sbr.rel (0) target = $region17
    $region16: #{tpu_custom_call.1} parent=1 // pred_region
      _
    $region17: #{tpu_custom_call.1} parent=1 // pred_fallthru
      _
    // Predicated region
    $region18: #{tpu_custom_call.1} parent=1 // pred_check
      _
    $region19: #{tpu_custom_call.1} parent=1 // pred_check_branch
      %30 = sbr.rel (0) target = $region21
    $region20: #{tpu_custom_call.1} parent=1 // pred_region
      _
    $region21: #{tpu_custom_call.1} parent=1 // pred_fallthru
      _
    // Predicated region
    $region22: #{tpu_custom_call.1} parent=1 // pred_check
      _
    $region23: #{tpu_custom_call.1} parent=1 // pred_check_branch
      %32 = sbr.rel (0) target = $region25
    $region24: #{tpu_custom_call.1} parent=1 // pred_region
      _
    $region25: #{tpu_custom_call.1} parent=1 // pred_fallthru
      _
    // Predicated region
    $region26: #{tpu_custom_call.1} parent=1 // pred_check
      _
    $region27: #{tpu_custom_call.1} parent=1 // pred_check_branch
      %34 = sbr.rel (0) target = $region29
    $region28: #{tpu_custom_call.1} parent=1 // pred_region
      _
    $region29: #{tpu_custom_call.1} parent=1 // pred_fallthru
      _
    // Predicated region
    $region30: #{tpu_custom_call.1} parent=1 // pred_check
      _
    $region31: #{tpu_custom_call.1} parent=1 // pred_check_branch
      %36 = sbr.rel (0) target = $region33
    $region32: #{tpu_custom_call.1} parent=1 // pred_region
      %38 = dma.done [#allocation4], 16
    $region33: #{tpu_custom_call.1} parent=1 // pred_fallthru
      _
    %39 = sfence
    %v41 = vld [vmem:[%s1] sm:$0xf]
    %v42 = vld [vmem:[%s1 + $0x4] sm:$0xf]
    %v43 = vld [vmem:[%s2] sm:$0xf]
    %v44 = vld [vmem:[%s2 + $0x4] sm:$0xf]
    %v47 = vunpack.c.l.b16 %v41
    %v48 = vunpack.c.l.b16 %v42
    %v49 = vpack.c.b16 %v48, %v47
    %v52 = vunpack.c.l.b16 %v43
    %v53 = vunpack.c.l.b16 %v44
    %v54 = vpack.c.b16 %v53, %v52
    %vm56 = vcmask 130048
    %v58 = vsel %vm56, %v49, 0
    %60 = vmatpush.bf16.msra.mxu0 0
    %61 = vmatpush.bf16.msra.mxu0 0
    %62 = vmatpush.bf16.msra.mxu0 0
    %63 = vmatpush.bf16.msra.mxu0 0
    %64 = vmatpush.bf16.msra.mxu0 0
    %65 = vmatpush.bf16.msra.mxu0 0
    %66 = vmatpush.bf16.msra.mxu0 0
    %67 = vmatpush.bf16.msra.mxu0 %v54
    %68 = vmatmul.bf16.gmra.mxu0 %v58
    %v69 = vpop.f32.mrf.mxu0
    %v70 = vadd.f32 0.0, %v69
    %v71 = vpop.f32.mrf.mxu0
    %v72 = vadd.f32 0.0, %v71
    %73 = vdwg.mxu0
    %v74 = vpack.c.bf16 %v70, %v70
    %v75 = vpack.c.bf16 %v72, %v72
    %v78 = vunpack.c.l.b16 %v74
    %v79 = vunpack.c.l.b16 %v75
    %v80 = vpack.c.b16 %v79, %v78
    %82 = vmatpush.bf16.msra.mxu0 0
    %83 = vmatpush.bf16.msra.mxu0 0
    %84 = vmatpush.bf16.msra.mxu0 0
    %85 = vmatpush.bf16.msra.mxu0 0
    %86 = vmatpush.bf16.msra.mxu0 0
    %87 = vmatpush.bf16.msra.mxu0 0
    %88 = vmatpush.bf16.msra.mxu0 0
    %89 = vmatpush.bf16.msra.mxu0 %v80
    %90 = vmatmul.bf16.gmra.mxu0 %v58
    %v91 = vpop.f32.mrf.mxu0
    %v92 = vadd.f32 0.0, %v91
    %v93 = vpop.f32.mrf.mxu0
    %v94 = vadd.f32 0.0, %v93
    %95 = vdwg.mxu0
    %v96 = vpack.c.bf16 %v92, %v92
    %v97 = vpack.c.bf16 %v94, %v94
    %98 = vrot.lane.b32.xlu0 %v80, 8
    %v99 = vpop.permute.xlu0 %98
    %v102 = vunpack.c.l.b16 %v96
    %v103 = vunpack.c.l.b16 %v97
    %v104 = vpack.c.b16 %v103, %v102
    %105 = vrot.lane.b32.xlu0 %v104, 16
    %v106 = vpop.permute.xlu0 %105
    %vm107 = vcmask 64512
    %v110 = vsel %vm107, %v54, %v99
    %v112 = vsel %vm56, %v110, %v106
    %v113 = vld [vmem:[%s3] sm:$0xf]
    %v114 = vld [vmem:[%s3 + $0x4] sm:$0xf]
    %v115 = vld [vmem:[%s3 + $0x8] sm:$0xf]
    %s116 = sld [smem:[#allocation2]]
    %v117 = vstv %s116
    %v121 = vunpack.c.l.b16 %v113
    %v122 = vunpack.c.l.b16 %v114
    %v123 = vunpack.c.l.b16 %v115
    %v124 = vpack.c.b16 %v122, %v121
    %v125 = vpack.c.b16 %v123, %v123
    %vm127 = vcmask 195584
    %v128 = vsel %vm127, %v112, 0
    %vm130 = vcmask 1043456
    %v132 = vsel %vm130, %v125, 0
    %134 = vmatpush.bf16.msra.mxu0 0
    %135 = vmatpush.bf16.msra.mxu0 0
    %136 = vmatpush.bf16.msra.mxu0 0
    %137 = vmatpush.bf16.msra.mxu0 0
    %138 = vmatpush.bf16.msra.mxu0 0
    %139 = vmatpush.bf16.msra.mxu0 0
    %140 = vmatpush.bf16.msra.mxu0 %v132
    %141 = vmatpush.bf16.msra.mxu0 %v124
    %142 = vmatmul.bf16.gmra.mxu0 %v128
    %v143 = vpop.f32.mrf.mxu0
    %v144 = vadd.f32 %v117, %v143
    %v145 = vpop.f32.mrf.mxu0
    %v146 = vadd.f32 %v117, %v145
    %147 = vdwg.mxu0
    %v148 = vmax.f32 %v144, 0.0
    %v149 = vmax.f32 %v146, 0.0
    %v150 = vpack.c.bf16 %v148, %v148
    %v151 = vpack.c.bf16 %v149, %v149
    %v154 = vunpack.c.l.b16 %v150
    %v155 = vunpack.c.l.b16 %v151
    %v156 = vpack.c.b16 %v155, %v154
    %158 = vmatpush.bf16.msra.mxu0 0
    %159 = vmatpush.bf16.msra.mxu0 0
    %160 = vmatpush.bf16.msra.mxu0 0
    %161 = vmatpush.bf16.msra.mxu0 0
    %162 = vmatpush.bf16.msra.mxu0 0
    %163 = vmatpush.bf16.msra.mxu0 0
    %164 = vmatpush.bf16.msra.mxu0 0
    %165 = vmatpush.bf16.msra.mxu0 %v156
    %166 = vmatmul.bf16.gmra.mxu0 %v58
    %v167 = vpop.f32.mrf.mxu0
    %v168 = vadd.f32 0.0, %v167
    %v169 = vpop.f32.mrf.mxu0
    %v170 = vadd.f32 0.0, %v169
    %171 = vdwg.mxu0
    %v172 = vpack.c.bf16 %v168, %v168
    %v173 = vpack.c.bf16 %v170, %v170
    %v176 = vunpack.c.l.b16 %v172
    %v177 = vunpack.c.l.b16 %v173
    %v178 = vpack.c.b16 %v177, %v176
    %179 = vrot.lane.b32.xlu0 %v178, 16
    %v180 = vpop.permute.xlu0 %179
    %v183 = vsel %vm56, %v156, %v180
    %v184 = vld [vmem:[%s4] sm:$0xf]
    %v185 = vld [vmem:[%s4 + $0x4] sm:$0xf]
    %v186 = vld [vmem:[%s4 + $0x8] sm:$0xf]
    %v187 = vld [vmem:[%s4 + $0xc] sm:$0xf]
    %s188 = sld [smem:[#allocation2 + $0x1]]
    %v189 = vstv %s188
    %v194 = vunpack.c.l.b16 %v184
    %v195 = vunpack.c.l.b16 %v185
    %v196 = vunpack.c.l.b16 %v186
    %v197 = vunpack.c.l.b16 %v187
    %v198 = vpack.c.b16 %v195, %v194
    %v199 = vpack.c.b16 %v197, %v196
    %vm202 = vcmask 261120
    %v203 = vsel %vm202, %v183, 0
    %205 = vmatpush.bf16.msra.mxu0 0
    %206 = vmatpush.bf16.msra.mxu0 0
    %207 = vmatpush.bf16.msra.mxu0 0
    %208 = vmatpush.bf16.msra.mxu0 0
    %209 = vmatpush.bf16.msra.mxu0 0
    %210 = vmatpush.bf16.msra.mxu0 0
    %211 = vmatpush.bf16.msra.mxu0 %v199
    %212 = vmatpush.bf16.msra.mxu0 %v198
    %213 = vmatmul.bf16.gmra.mxu0 %v203
    %v214 = vpop.f32.mrf.mxu0
    %v215 = vadd.f32 %v189, %v214
    %v216 = vpop.f32.mrf.mxu0
    %v217 = vadd.f32 %v189, %v216
    %218 = vdwg.mxu0
    %v219 = vmax.f32 %v215, 0.0
    %v220 = vmax.f32 %v217, 0.0
    %v221 = vpack.c.bf16 %v220, %v219
    %v222 = vld [vmem:[%s5] sm:$0xf]
    %v223 = vld [vmem:[%s5 + $0x4] sm:$0xf]
    %v224 = vld [vmem:[%s6] sm:$0x1]
    %v226 = vperm.slane %v224, 0
    %v230 = vunpack.c.l.b16 %v222
    %v231 = vunpack.c.l.b16 %v223
    %v232 = vpack.c.b16 %v231, %v230
    %v235 = vsel %vm56, %v221, 0
    %237 = vmatpush.bf16.msra.mxu0 0
    %238 = vmatpush.bf16.msra.mxu0 0
    %239 = vmatpush.bf16.msra.mxu0 0
    %240 = vmatpush.bf16.msra.mxu0 0
    %241 = vmatpush.bf16.msra.mxu0 0
    %242 = vmatpush.bf16.msra.mxu0 0
    %243 = vmatpush.bf16.msra.mxu0 0
    %244 = vmatpush.bf16.msra.mxu0 %v232
    %245 = vmatmul.bf16.gmra.mxu0 %v235
    %v246 = vpop.f32.mrf.mxu0
    %v247 = vadd.f32 %v226, %v246
    %v248 = vpop.f32.mrf.mxu0
    %v249 = vadd.f32 %v226, %v248
    %250 = vdwg.mxu0
    %251 = vst [vmem:[#allocation5] sm:$0xff] %v247
    %252 = vst [vmem:[#allocation5 + $0x8] sm:$0xff] %v249
    // Predicated region
    $region34: #{tpu_custom_call.1} parent=1 // pred_check
      _
    $region35: #{tpu_custom_call.1} parent=1 // pred_check_branch
      %254 = sbr.rel (0) target = $region37
    $region36: #{tpu_custom_call.1} parent=1 // pred_region
      %256 = vsyncadd [#allocation3], 0
      %s257 = sshll.u32 [#allocation5], 4
      %s258 = int_to_ptr.vmem [resolvable:$true] %s257
      %s259 = sshll.u32 %s7, 4
      %s260 = int_to_ptr.hbm [resolvable:$true] %s259
      %265 = dma.vmem_to_hbm [thread:$0]  %s258, 256, %s260, [#allocation3], 128, 128, 8
    $region37: #{tpu_custom_call.1} parent=1 // pred_fallthru
      _
    // Predicated region
    $region38: #{tpu_custom_call.1} parent=1 // pred_check
      _
    $region39: #{tpu_custom_call.1} parent=1 // pred_check_branch
      %267 = sbr.rel (0) target = $region41
    $region40: #{tpu_custom_call.1} parent=1 // pred_region
      %269 = dma.done [#allocation3], 256
    $region41: #{tpu_custom_call.1} parent=1 // pred_fallthru
      _
    %270 = vsyncpa [#allocation3], 1
    %271 = vsyncpa [#allocation4], 1

</llo_original>
